<compile_context>
chip_gen: v6e
topology: v6e:2x2x1
jax: 0.10.0
libtpu: 0.0.40
codegen_flags: <defaults>
</compile_context>

<pallas_src>
import functools

import jax
import jax.numpy as jnp
from jax.experimental import pallas as pl
from jax.experimental.pallas import tpu as pltpu

_LANE = 128
_SUBLANE = 8


def _round_up(v, m):
    return ((v + m - 1) // m) * m


def _highway_kernel(x_ref, w_ref, b_ref, out_ref, *, n_layer, d_pad):
    # x_ref:  [tm, Dp] row tile (native dtype)
    # w_ref:  [L, Dp, 2*Dp] fused (linear | gate) weights, [in, out] layout
    # b_ref:  [L, 1, 2*Dp]  fused biases (f32)
    x = x_ref[...]
    in_dtype = x.dtype

    # n_layer is small & static -> unrolled; x stays resident across layers.
    for i in range(n_layer):
        # Single fused MXU matmul per layer; f32 accumulation.
        y = jnp.dot(x, w_ref[i], preferred_element_type=jnp.float32) + b_ref[i]
        h = jnp.maximum(y[:, :d_pad], 0.0)        # relu branch (lane-aligned slice)
        g = jax.nn.sigmoid(y[:, d_pad:])          # gate branch -> EUP transcendental
        xf = x.astype(jnp.float32)
        # g*h + (1-g)*x == x + g*(h - x): fewer VPU ops, one live temp.
        x = (xf + g * (h - xf)).astype(in_dtype)  # back to native dtype for next dot

    out_ref[...] = x.astype(out_ref.dtype)


def prepare_highway_params(w_lin, b_lin, w_gate, b_gate):
    """One-time weight prep (hoist out of the per-call hot path).

    w_lin/w_gate: [L, D, D] in PyTorch nn.Linear layout ([out, in]).
    b_lin/b_gate: [L, D].
    Returns fused (W [L, Dp, 2*Dp], B [L, 1, 2*Dp]) with Dp = round_up(D, 128).
    """
    L, D, _ = w_lin.shape
    d_pad = max(_round_up(D, _LANE), _LANE)

    def prep_w(w):
        wt = jnp.swapaxes(w, -1, -2)              # -> [L, in, out] for direct MXU use
        return jnp.pad(wt, ((0, 0), (0, d_pad - D), (0, d_pad - D)))

    def prep_b(b):
        return jnp.pad(b.astype(jnp.float32), ((0, 0), (0, d_pad - D)))

    w_fused = jnp.concatenate([prep_w(w_lin), prep_w(w_gate)], axis=-1)
    b_fused = jnp.concatenate([prep_b(b_lin), prep_b(b_gate)], axis=-1)
    return w_fused, b_fused.reshape(L, 1, 2 * d_pad)


def _default_block_rows():
    # Bigger row tiles on 128 MiB-VMEM parts (v5e/v6e); smaller on v7x (64 MiB).
    try:
        cap = pltpu.get_tpu_info().vmem_capacity_bytes
    except Exception:
        cap = 64 << 20
    return 2048 if cap >= (96 << 20) else 512


def highway_network(x, w_fused, b_fused, *, block_rows=None):
    """Pallas TPU HighwayNetwork.forward.

    x:        any shape [..., D]
    w_fused:  [L, Dp, 2*Dp]   (from prepare_highway_params)
    b_fused:  [L, 1, 2*Dp]
    Returns:  same shape/dtype as x.
    """
    orig_shape = x.shape
    D = orig_shape[-1]
    L, d_pad, _ = w_fused.shape
    if block_rows is None:
        block_rows = _default_block_rows()

    # Flatten leading dims -> lane-dense [N, Dp] slab.
    x2 = x.reshape(-1, D)
    N = x2.shape[0]
    if d_pad != D:
        x2 = jnp.pad(x2, ((0, 0), (0, d_pad - D)))   # inert zero columns

    # Rows padded only to the sublane multiple (8); the tail tile is clipped by
    # the grid (pl.cdiv) instead of a pad-to-tile copy of x.
    n8 = _round_up(max(N, 1), _SUBLANE)
    if n8 != N:
        x2 = jnp.pad(x2, ((0, n8 - N), (0, 0)))

    # Row tile: multiple of 8, capped by block_rows; keep >= 2 grid steps when
    # possible so v7x can shard the "parallel" axis across both TensorCores.
    tm = min(_round_up(block_rows, _SUBLANE), n8)
    if n8 >= 2 * _SUBLANE:
        tm = min(tm, _round_up(pl.cdiv(n8, 2), _SUBLANE))
    grid = (pl.cdiv(n8, tm),)

    # Explicit scoped-VMEM budget: resident (double-buffered) weights + biases
    # plus double-buffered x/out tiles, with headroom.  Clamped to be safe on
    # all generations (v7x has only 64 MiB physical VMEM).
    w_bytes = w_fused.size * w_fused.dtype.itemsize
    b_bytes = b_fused.size * b_fused.dtype.itemsize
    tile_bytes = tm * d_pad * x2.dtype.itemsize
    needed = 2 * (w_bytes + b_bytes) + 2 * 2 * tile_bytes
    vmem_limit = int(needed * 1.25) + (4 << 20)
    vmem_limit = min(max(vmem_limit, 32 << 20), 64 << 20)

    const3 = lambda i: (0, 0, 0)   # weights/biases resident across the grid
    kernel = functools.partial(_highway_kernel, n_layer=L, d_pad=d_pad)

    out = pl.pallas_call(
        kernel,
        out_shape=jax.ShapeDtypeStruct((n8, d_pad), x.dtype),
        grid_spec=pltpu.PrefetchScalarGridSpec(
            num_scalar_prefetch=0,
            grid=grid,
            in_specs=[
                pl.BlockSpec((tm, d_pad), lambda i: (i, 0)),      # x row tile
                pl.BlockSpec((L, d_pad, 2 * d_pad), const3),      # fused weights
                pl.BlockSpec((L, 1, 2 * d_pad), const3),          # fused biases
            ],
            out_specs=pl.BlockSpec((tm, d_pad), lambda i: (i, 0)),
        ),
        compiler_params=pltpu.CompilerParams(
            dimension_semantics=("parallel",),
            vmem_limit_bytes=vmem_limit,
        ),
    )(x2, w_fused, b_fused)

    out = out[:N, :D]
    return out.reshape(orig_shape)


def _reference(x, w_lin, b_lin, w_gate, b_gate):
    """Pure-JAX reference matching the PyTorch forward (full-precision matmuls)."""
    hp = jax.lax.Precision.HIGHEST
    L = w_lin.shape[0]
    for i in range(L):
        gate = jax.nn.sigmoid(jnp.matmul(x, w_gate[i].T, precision=hp) + b_gate[i])
        nonlinear = jax.nn.relu(jnp.matmul(x, w_lin[i].T, precision=hp) + b_lin[i])
        x = gate * nonlinear + (1.0 - gate) * x
    return x


if __name__ == "__main__":
    n_layer, input_size = 2, 32
    batch, seq = 2, 8

    key = jax.random.PRNGKey(0)
    kx, kwl, kbl, kwg, kbg = jax.random.split(key, 5)

    scale = 1.0 / (input_size ** 0.5)
    x = jax.random.normal(kx, (batch, seq, input_size), dtype=jnp.float32)
    w_lin = jax.random.normal(
        kwl, (n_layer, input_size, input_size), dtype=jnp.float32) * scale
    b_lin = jax.random.normal(kbl, (n_layer, input_size), dtype=jnp.float32) * 0.1
    w_gate = jax.random.normal(
        kwg, (n_layer, input_size, input_size), dtype=jnp.float32) * scale
    b_gate = jax.random.normal(kbg, (n_layer, input_size), dtype=jnp.float32) * 0.1

    # One-time (cacheable) weight prep, then the fused kernel call.
    w_fused, b_fused = prepare_highway_params(w_lin, b_lin, w_gate, b_gate)
    out = highway_network(x, w_fused, b_fused)
    jax.block_until_ready(out)

    ref = _reference(x, w_lin, b_lin, w_gate, b_gate)
    assert out.shape == x.shape
    assert out.dtype == x.dtype
    assert jnp.allclose(out, ref, atol=1e-4, rtol=1e-4), (
        float(jnp.max(jnp.abs(out - ref))))

    print("KERNEL_OK")
</pallas_src>

<mosaic_0001>
module attributes {stable_mosaic.version = 11 : i64} {
  func.func @_highway_kernel(%arg0: i32, %arg1: memref<8x128xf32, #tpu.memory_space<vmem>>, %arg2: memref<2x128x256xf32, #tpu.memory_space<vmem>>, %arg3: memref<2x1x256xf32, #tpu.memory_space<vmem>>, %arg4: memref<8x128xf32, #tpu.memory_space<vmem>>) attributes {dimension_semantics = [#tpu.dimension_semantics<parallel>], iteration_bounds = array<i64: 2>, scalar_prefetch = 0 : i64, scratch_operands = 0 : i64, tpu.core_type = #tpu.core_type<tc>, window_params = [{transform_indices = @transform_0, window_bounds = array<i64: 8, 128>}, {pipeline_mode = #tpu.pipeline_mode<synchronous>, transform_indices = @transform_1, window_bounds = array<i64: 2, 128, 256>}, {pipeline_mode = #tpu.pipeline_mode<synchronous>, transform_indices = @transform_2, window_bounds = array<i64: 2, 1, 256>}, {transform_indices = @transform_3, window_bounds = array<i64: 8, 128>}]} {
    %c0 = arith.constant 0 : index
    %c0_0 = arith.constant 0 : index
    %0 = vector.load %arg1[%c0, %c0_0] : memref<8x128xf32, #tpu.memory_space<vmem>>, vector<8x128xf32>
    %c0_1 = arith.constant 0 : index
    %c0_2 = arith.constant 0 : index
    %c0_3 = arith.constant 0 : index
    %1 = vector.load %arg2[%c0_1, %c0_2, %c0_3] : memref<2x128x256xf32, #tpu.memory_space<vmem>>, vector<1x128x256xf32>
    %2 = vector.shape_cast %1 : vector<1x128x256xf32> to vector<128x256xf32>
    %cst = arith.constant dense<0.000000e+00> : vector<8x256xf32>
    %3 = tpu.matmul %0, %2, %cst {dimension_numbers = #tpu.dot_dimension_numbers<[1], [0], [0], [1], [0, 0, 1, 1], [], []>} : vector<8x128xf32>, vector<128x256xf32>, vector<8x256xf32> -> vector<8x256xf32>
    %c0_4 = arith.constant 0 : index
    %c0_5 = arith.constant 0 : index
    %c0_6 = arith.constant 0 : index
    %4 = vector.load %arg3[%c0_4, %c0_5, %c0_6] : memref<2x1x256xf32, #tpu.memory_space<vmem>>, vector<1x1x256xf32>
    %5 = vector.shape_cast %4 : vector<1x1x256xf32> to vector<1x256xf32>
    %6 = vector.broadcast %5 : vector<1x256xf32> to vector<8x256xf32>
    %7 = arith.addf %3, %6 : vector<8x256xf32>
    %8 = vector.extract_strided_slice %7 {offsets = [0, 0], sizes = [8, 128], strides = [1, 1]} : vector<8x256xf32> to vector<8x128xf32>
    %cst_7 = arith.constant 0.000000e+00 : f32
    %9 = vector.broadcast %cst_7 : f32 to vector<8x128xf32>
    %10 = arith.maximumf %8, %9 : vector<8x128xf32>
    %11 = vector.extract_strided_slice %7 {offsets = [0, 128], sizes = [8, 128], strides = [1, 1]} : vector<8x256xf32> to vector<8x128xf32>
    %12 = arith.negf %11 : vector<8x128xf32>
    %13 = math.exp %12 : vector<8x128xf32>
    %cst_8 = arith.constant 1.000000e+00 : f32
    %14 = vector.broadcast %cst_8 : f32 to vector<8x128xf32>
    %15 = arith.addf %14, %13 : vector<8x128xf32>
    %16 = arith.divf %14, %15 : vector<8x128xf32>
    %17 = arith.subf %10, %0 : vector<8x128xf32>
    %18 = arith.mulf %16, %17 : vector<8x128xf32>
    %19 = arith.addf %0, %18 : vector<8x128xf32>
    %c1 = arith.constant 1 : index
    %c0_9 = arith.constant 0 : index
    %c0_10 = arith.constant 0 : index
    %20 = vector.load %arg2[%c1, %c0_9, %c0_10] : memref<2x128x256xf32, #tpu.memory_space<vmem>>, vector<1x128x256xf32>
    %21 = vector.shape_cast %20 : vector<1x128x256xf32> to vector<128x256xf32>
    %cst_11 = arith.constant dense<0.000000e+00> : vector<8x256xf32>
    %22 = tpu.matmul %19, %21, %cst_11 {dimension_numbers = #tpu.dot_dimension_numbers<[1], [0], [0], [1], [0, 0, 1, 1], [], []>} : vector<8x128xf32>, vector<128x256xf32>, vector<8x256xf32> -> vector<8x256xf32>
    %c1_12 = arith.constant 1 : index
    %c0_13 = arith.constant 0 : index
    %c0_14 = arith.constant 0 : index
    %23 = vector.load %arg3[%c1_12, %c0_13, %c0_14] : memref<2x1x256xf32, #tpu.memory_space<vmem>>, vector<1x1x256xf32>
    %24 = vector.shape_cast %23 : vector<1x1x256xf32> to vector<1x256xf32>
    %25 = vector.broadcast %24 : vector<1x256xf32> to vector<8x256xf32>
    %26 = arith.addf %22, %25 : vector<8x256xf32>
    %27 = vector.extract_strided_slice %26 {offsets = [0, 0], sizes = [8, 128], strides = [1, 1]} : vector<8x256xf32> to vector<8x128xf32>
    %cst_15 = arith.constant 0.000000e+00 : f32
    %28 = vector.broadcast %cst_15 : f32 to vector<8x128xf32>
    %29 = arith.maximumf %27, %28 : vector<8x128xf32>
    %30 = vector.extract_strided_slice %26 {offsets = [0, 128], sizes = [8, 128], strides = [1, 1]} : vector<8x256xf32> to vector<8x128xf32>
    %31 = arith.negf %30 : vector<8x128xf32>
    %32 = math.exp %31 : vector<8x128xf32>
    %cst_16 = arith.constant 1.000000e+00 : f32
    %33 = vector.broadcast %cst_16 : f32 to vector<8x128xf32>
    %34 = arith.addf %33, %32 : vector<8x128xf32>
    %35 = arith.divf %33, %34 : vector<8x128xf32>
    %36 = arith.subf %29, %19 : vector<8x128xf32>
    %37 = arith.mulf %35, %36 : vector<8x128xf32>
    %38 = arith.addf %19, %37 : vector<8x128xf32>
    %c0_17 = arith.constant 0 : index
    %c0_18 = arith.constant 0 : index
    %39 = vector.load %arg4[%c0_17, %c0_18] : memref<8x128xf32, #tpu.memory_space<vmem>>, vector<8x128xf32>
    tpu.vector_store %arg4[%c0_17, %c0_18], %38 {strides = array<i32>} : memref<8x128xf32, #tpu.memory_space<vmem>>, vector<8x128xf32>,
    return
  }
  func.func @transform_0(%arg0: i32) -> (i32, i32) {
    %c0_i32 = arith.constant 0 : i32
    %c0_i32_0 = arith.constant 0 : i32
    return %arg0, %c0_i32 : i32, i32
  }
  func.func @transform_1(%arg0: i32) -> (i32, i32, i32) {
    %c0_i32 = arith.constant 0 : i32
    %c0_i32_0 = arith.constant 0 : i32
    %c0_i32_1 = arith.constant 0 : i32
    %c0_i32_2 = arith.constant 0 : i32
    return %c0_i32, %c0_i32_0, %c0_i32_1 : i32, i32, i32
  }
  func.func @transform_2(%arg0: i32) -> (i32, i32, i32) {
    %c0_i32 = arith.constant 0 : i32
    %c0_i32_0 = arith.constant 0 : i32
    %c0_i32_1 = arith.constant 0 : i32
    %c0_i32_2 = arith.constant 0 : i32
    return %c0_i32, %c0_i32_0, %c0_i32_1 : i32, i32, i32
  }
  func.func @transform_3(%arg0: i32) -> (i32, i32) {
    %c0_i32 = arith.constant 0 : i32
    %c0_i32_0 = arith.constant 0 : i32
    return %arg0, %c0_i32 : i32, i32
  }
}

</mosaic_0001>

<llo_original>
// kernel: tpu_custom_call.1
$region0: #{tpu_custom_call.1}
  #allocation0 [shape = 'u32[]', space=smem, size = 0x4, offset = 0x4, fixed_abs, tag = 'smem constant byte address 0x4 - core index']
  #allocation1 [shape = 'u32[144,128]{1,0:T(1,128)}', space=vmem, size = 0x12000, scoped, tag = 'internal scratch']
  %s0 = inlined_call_operand.hbm [shape: f32[16,128], index: 0, kind: input, shape index: {}]
  %s1 = inlined_call_operand.hbm [shape: f32[2,128,256], index: 1, kind: input, shape index: {}]
  %s2 = inlined_call_operand.hbm [shape: f32[2,1,256], index: 2, kind: input, shape index: {}]
  %s3 = inlined_call_operand.hbm [shape: f32[16,128], index: 3, kind: output, shape index: {}]
  %s4 = sld [smem:[#allocation0]]
  $region57: #{tpu_custom_call.1} parent=0
    _
  %s6 = ssub.s32 1, %s4
  %s7 = scalar_select 0, %s6, %s4
  $region1: #{tpu_custom_call.1} parent=0
    #allocation2 [shape = 'u8[8192]{0}', space=vmem, size = 0x2000, scoped, tag = 'input window, operand 0']
    #allocation3 [shape = 's32[2]{0}', space=sflag, size = 0x8, scoped, tag = 'scoped memory for tpu_custom_call.1']
    #allocation4 [shape = 's32[2]{0}', space=sflag, size = 0x8, scoped, tag = 'scoped memory for tpu_custom_call.1']
    #allocation5 [shape = 'u8[262144]{0}', space=vmem, size = 0x40000, scoped, tag = 'input window, operand 1, single buffered']
    #allocation6 [shape = 's32[1]{0}', space=sflag, size = 0x4, scoped, tag = 'scoped memory for tpu_custom_call.1']
    #allocation7 [shape = 'u8[2048]{0}', space=vmem, size = 0x800, scoped, tag = 'input window, operand 2, single buffered']
    #allocation8 [shape = 'u8[8192]{0}', space=vmem, size = 0x2000, scoped, tag = 'output window, operand 0']
    %8 = vsyncpa [#allocation3], 0
    %s9 = scalar_lea.sflag [#allocation3], 1
    %10 = vsyncpa %s9, 0
    %11 = vsyncpa [#allocation6], 0
    %12 = vsyncpa [#allocation4], 0
    %s13 = scalar_lea.sflag [#allocation4], 1
    %14 = vsyncpa %s13, 0
    loop: start=0, step=1, limit=4
    $region2: #{tpu_custom_call.1} parent=1 // loop_pre_header
      _
    $region3: #{tpu_custom_call.1} parent=1 // loop_header
      %s16 = sphi 0, %s20
      %p17 = scmp.ge.s32.totalorder %s16, 4
      %s26 = sphi 0, %s28
      %s29 = sphi 0, %s26
      %s30 = sphi 0, %s29
      %s46 = sphi 0, %s30
      %s50 = sphi 0, %s50
      %s52 = sphi 0, %s50
      %s53 = sphi 0, %s52
      %s67 = sphi 0, %s53
      %s71 = sphi 0, %s71
      %s73 = sphi 0, %s71
      %s74 = sphi 0, %s73
      %s88 = sphi 0, %s74
      %s94 = sphi 0, %s96
      %s97 = sphi 0, %s94
      %s98 = sphi 0, %s97
      %s114 = sphi 0, %s98
    $region4: #{tpu_custom_call.1} parent=1 // loop_header_branch
      %19 = sbr.rel (%p17) target = $region8
    $region5: #{tpu_custom_call.1} parent=1 // loop_body
      %s21 = ssub.s32 %s16, 1
      %s22 = ssub.s32 %s16, 2
      %s23 = sadd.s32 %s16, 1
      %s24 = ssub.s32 %s16, %s23
      %p25 = scmp.eq.s32.totalorder %s24, 0
      %s27 = sadd.s32 %s26, 1
      %s28 = scalar_select %p25, %s26, %s27
      %p31 = pneg %p25
      %p32 = scmp.eq.s32.totalorder %s16, 1
      %p33 = por %p31, %p32
      %p34 = scmp.ne.s32.totalorder %s26, %s29
      %p35 = scmp.eq.s32.totalorder %s16, 0
      %p36 = por %p34, %p35
      %p37 = scmp.ne.s32.totalorder %s26, %s29
      %p38 = scmp.eq.s32.totalorder %s21, 1
      %p39 = por %p37, %p38
      %p40 = scmp.ne.s32.totalorder %s29, %s30
      %p41 = scmp.eq.s32.totalorder %s21, 0
      %p42 = por %p40, %p41
      %p43 = scmp.ne.s32.totalorder %s29, %s30
      %p44 = scmp.eq.s32.totalorder %s22, 1
      %p45 = por %p43, %p44
      %p47 = scmp.ne.s32.totalorder %s30, %s46
      %p48 = scmp.eq.s32.totalorder %s22, 0
      %p49 = por %p47, %p48
      %s51 = sadd.s32 %s50, 1
      %p54 = scmp.eq.s32.totalorder %s16, 1
      %p55 = scmp.ne.s32.totalorder %s50, %s52
      %p56 = scmp.eq.s32.totalorder %s16, 0
      %p57 = por %p55, %p56
      %p58 = scmp.ne.s32.totalorder %s50, %s52
      %p59 = scmp.eq.s32.totalorder %s21, 1
      %p60 = por %p58, %p59
      %p61 = scmp.ne.s32.totalorder %s52, %s53
      %p62 = scmp.eq.s32.totalorder %s21, 0
      %p63 = por %p61, %p62
      %p64 = scmp.ne.s32.totalorder %s52, %s53
      %p65 = scmp.eq.s32.totalorder %s22, 1
      %p66 = por %p64, %p65
      %p68 = scmp.ne.s32.totalorder %s53, %s67
      %p69 = scmp.eq.s32.totalorder %s22, 0
      %p70 = por %p68, %p69
      %s72 = sadd.s32 %s71, 1
      %p75 = scmp.eq.s32.totalorder %s16, 1
      %p76 = scmp.ne.s32.totalorder %s71, %s73
      %p77 = scmp.eq.s32.totalorder %s16, 0
      %p78 = por %p76, %p77
      %p79 = scmp.ne.s32.totalorder %s71, %s73
      %p80 = scmp.eq.s32.totalorder %s21, 1
      %p81 = por %p79, %p80
      %p82 = scmp.ne.s32.totalorder %s73, %s74
      %p83 = scmp.eq.s32.totalorder %s21, 0
      %p84 = por %p82, %p83
      %p85 = scmp.ne.s32.totalorder %s73, %s74
      %p86 = scmp.eq.s32.totalorder %s22, 1
      %p87 = por %p85, %p86
      %p89 = scmp.ne.s32.totalorder %s74, %s88
      %p90 = scmp.eq.s32.totalorder %s22, 0
      %p91 = por %p89, %p90
      %s92 = ssub.s32 %s16, %s23
      %p93 = scmp.eq.s32.totalorder %s92, 0
      %s95 = sadd.s32 %s94, 1
      %s96 = scalar_select %p93, %s94, %s95
      %p99 = pneg %p93
      %p100 = scmp.eq.s32.totalorder %s16, 1
      %p101 = por %p99, %p100
      %p102 = scmp.ne.s32.totalorder %s94, %s97
      %p103 = scmp.eq.s32.totalorder %s16, 0
      %p104 = por %p102, %p103
      %p105 = scmp.ne.s32.totalorder %s94, %s97
      %p106 = scmp.eq.s32.totalorder %s21, 1
      %p107 = por %p105, %p106
      %p108 = scmp.ne.s32.totalorder %s97, %s98
      %p109 = scmp.eq.s32.totalorder %s21, 0
      %p110 = por %p108, %p109
      %p111 = scmp.ne.s32.totalorder %s97, %s98
      %p112 = scmp.eq.s32.totalorder %s22, 1
      %p113 = por %p111, %p112
      %p115 = scmp.ne.s32.totalorder %s98, %s114
      %p116 = scmp.eq.s32.totalorder %s22, 0
      %p117 = por %p115, %p116
      %p118 = scmp.le.s32.totalorder 1, %s16
      %p119 = scmp.lt.s32.totalorder %s16, 3
      %p120 = pnand %p118, %p119
      %p121 = pneg %p120
      // Predicated region
      $region9: #{tpu_custom_call.1} parent=5 // pred_check
        _
      $region10: #{tpu_custom_call.1} parent=5 // pred_check_branch
        %123 = sbr.rel (%p120) target = $region12
      $region11: #{tpu_custom_call.1} parent=5 // pred_region
        %s124 = ssub.s32 %s16, 1
        // Predicated region
        $region13: #{tpu_custom_call.1} parent=11 // pred_check
          %p125 = pneg %p63
        $region14: #{tpu_custom_call.1} parent=11 // pred_check_branch
          %127 = sbr.rel (%p125) target = $region16
        $region15: #{tpu_custom_call.1} parent=11 // pred_region
          %s129 = ssub.s32 8192, 8192
          %130 = vsyncadd [#allocation6], %s129
          %s131 = sshll.u32 [#allocation5], 4
          %s132 = int_to_ptr.vmem [resolvable:$true] %s131
          %137 = dma.hbm_to_vmem [thread:$0]  %s1, 8192, %s132, [#allocation6], 256, 256, 16
        $region16: #{tpu_custom_call.1} parent=11 // pred_fallthru
          _
        // Predicated region
        $region17: #{tpu_custom_call.1} parent=11 // pred_check
          %p138 = pneg %p84
        $region18: #{tpu_custom_call.1} parent=11 // pred_check_branch
          %140 = sbr.rel (%p138) target = $region20
        $region19: #{tpu_custom_call.1} parent=11 // pred_region
          %s142 = ssub.s32 64, 64
          %143 = vsyncadd [#allocation6], %s142
          %s144 = sshll.u32 [#allocation7], 4
          %s145 = int_to_ptr.vmem [resolvable:$true] %s144
          %150 = dma.hbm_to_vmem [thread:$0]  %s2, 64, %s145, [#allocation6], 32, 32, 2
        $region20: #{tpu_custom_call.1} parent=11 // pred_fallthru
          _
      $region12: #{tpu_custom_call.1} parent=5 // pred_fallthru
        _
      %p151 = scmp.lt.s32.totalorder %s16, 2
      // Predicated region
      $region21: #{tpu_custom_call.1} parent=5 // pred_check
        %p152 = pneg %p151
      $region22: #{tpu_custom_call.1} parent=5 // pred_check_branch
        %154 = sbr.rel (%p152) target = $region24
      $region23: #{tpu_custom_call.1} parent=5 // pred_region
        // Predicated region
        $region25: #{tpu_custom_call.1} parent=23 // pred_check
          %p155 = pneg %p36
        $region26: #{tpu_custom_call.1} parent=23 // pred_check_branch
          %157 = sbr.rel (%p155) target = $region28
        $region27: #{tpu_custom_call.1} parent=23 // pred_region
          %s158 = sand.u32 %s26, 1
          %s159 = scalar_lea.sflag [#allocation3], %s158
          %s160 = sand.u32 %s26, 1
          %s161 = smul.addr %s160, 8
          %s162 = scalar_lea.vmem [#allocation2], %s161
          %s164 = ssub.s32 128, 128
          %165 = vsyncadd %s159, %s164
          %s166 = smul.addr %s16, 128
          %s167 = scalar_lea.hbm %s0, %s166
          %s169 = sshll.u32 %s162, 4
          %s170 = int_to_ptr.vmem [resolvable:$true] %s169
          %172 = dma.hbm_to_vmem [thread:$0]  %s167, 128, %s170, %s159
        $region28: #{tpu_custom_call.1} parent=23 // pred_fallthru
          _
      $region24: #{tpu_custom_call.1} parent=5 // pred_fallthru
        _
      %p173 = scmp.le.s32.totalorder 1, %s16
      %p174 = scmp.lt.s32.totalorder %s16, 3
      %p175 = pnand %p173, %p174
      %p176 = pneg %p175
      // Predicated region
      $region29: #{tpu_custom_call.1} parent=5 // pred_check
        _
      $region30: #{tpu_custom_call.1} parent=5 // pred_check_branch
        %178 = sbr.rel (%p175) target = $region32
      $region31: #{tpu_custom_call.1} parent=5 // pred_region
        %s179 = ssub.s32 %s16, 1
        %s180 = sand.u32 %s29, 1
        %s181 = scalar_lea.sflag [#allocation3], %s180
        %s182 = sand.u32 %s29, 1
        %s183 = smul.addr %s182, 8
        %s184 = scalar_lea.vmem [#allocation2], %s183
        // Predicated region
        $region33: #{tpu_custom_call.1} parent=31 // pred_check
          %p185 = pneg %p42
        $region34: #{tpu_custom_call.1} parent=31 // pred_check_branch
          %187 = sbr.rel (%p185) target = $region36
        $region35: #{tpu_custom_call.1} parent=31 // pred_region
          %188 = dma.done %s181, 128
        $region36: #{tpu_custom_call.1} parent=31 // pred_fallthru
          _
        // Predicated region
        $region37: #{tpu_custom_call.1} parent=31 // pred_check
          %p189 = pneg %p63
        $region38: #{tpu_custom_call.1} parent=31 // pred_check_branch
          %191 = sbr.rel (%p189) target = $region40
        $region39: #{tpu_custom_call.1} parent=31 // pred_region
          %192 = dma.done [#allocation6], 8192
        $region40: #{tpu_custom_call.1} parent=31 // pred_fallthru
          _
        // Predicated region
        $region41: #{tpu_custom_call.1} parent=31 // pred_check
          %p193 = pneg %p84
        $region42: #{tpu_custom_call.1} parent=31 // pred_check_branch
          %195 = sbr.rel (%p193) target = $region44
        $region43: #{tpu_custom_call.1} parent=31 // pred_region
          %196 = dma.done [#allocation6], 64
        $region44: #{tpu_custom_call.1} parent=31 // pred_fallthru
          _
        %s197 = sand.u32 %s29, 1
        %s198 = scalar_lea.sflag [#allocation3], %s197
        %s199 = sand.u32 %s29, 1
        %s200 = smul.addr %s199, 8
        %s201 = scalar_lea.vmem [#allocation2], %s200
        %p202 = pneg %p42
        %p203 = pneg %p39
        %p204 = pneg %p63
        %p205 = pneg %p60
        %p206 = pneg %p84
        %p207 = pneg %p81
        %p208 = pneg %p110
        %p209 = pneg %p107
        %s210 = sand.u32 %s97, 1
        %s211 = scalar_lea.sflag [#allocation4], %s210
        %s212 = sand.u32 %s97, 1
        %s213 = smul.addr %s212, 8
        %s214 = scalar_lea.vmem [#allocation8], %s213
        %v215 = vld [vmem:[%s184] sm:$0xff]
        %v216 = vld [vmem:[#allocation5] sm:$0xff]
        %v217 = vld [vmem:[#allocation5 + $0x8] sm:$0xff]
        %v218 = vld [vmem:[#allocation5 + $0x10] sm:$0xff]
        %v219 = vld [vmem:[#allocation5 + $0x18] sm:$0xff]
        %v220 = vld [vmem:[#allocation5 + $0x20] sm:$0xff]
        %v221 = vld [vmem:[#allocation5 + $0x28] sm:$0xff]
        %v222 = vld [vmem:[#allocation5 + $0x30] sm:$0xff]
        %v223 = vld [vmem:[#allocation5 + $0x38] sm:$0xff]
        %v224 = vld [vmem:[#allocation5 + $0x40] sm:$0xff]
        %v225 = vld [vmem:[#allocation5 + $0x48] sm:$0xff]
        %v226 = vld [vmem:[#allocation5 + $0x50] sm:$0xff]
        %v227 = vld [vmem:[#allocation5 + $0x58] sm:$0xff]
        %v228 = vld [vmem:[#allocation5 + $0x60] sm:$0xff]
        %v229 = vld [vmem:[#allocation5 + $0x68] sm:$0xff]
        %v230 = vld [vmem:[#allocation5 + $0x70] sm:$0xff]
        %v231 = vld [vmem:[#allocation5 + $0x78] sm:$0xff]
        %v232 = vld [vmem:[#allocation5 + $0x80] sm:$0xff]
        %v233 = vld [vmem:[#allocation5 + $0x88] sm:$0xff]
        %v234 = vld [vmem:[#allocation5 + $0x90] sm:$0xff]
        %v235 = vld [vmem:[#allocation5 + $0x98] sm:$0xff]
        %v236 = vld [vmem:[#allocation5 + $0xa0] sm:$0xff]
        %v237 = vld [vmem:[#allocation5 + $0xa8] sm:$0xff]
        %v238 = vld [vmem:[#allocation5 + $0xb0] sm:$0xff]
        %v239 = vld [vmem:[#allocation5 + $0xb8] sm:$0xff]
        %v240 = vld [vmem:[#allocation5 + $0xc0] sm:$0xff]
        %v241 = vld [vmem:[#allocation5 + $0xc8] sm:$0xff]
        %v242 = vld [vmem:[#allocation5 + $0xd0] sm:$0xff]
        %v243 = vld [vmem:[#allocation5 + $0xd8] sm:$0xff]
        %v244 = vld [vmem:[#allocation5 + $0xe0] sm:$0xff]
        %v245 = vld [vmem:[#allocation5 + $0xe8] sm:$0xff]
        %v246 = vld [vmem:[#allocation5 + $0xf0] sm:$0xff]
        %v247 = vld [vmem:[#allocation5 + $0xf8] sm:$0xff]
        %v248 = vld [vmem:[#allocation7] sm:$0x3]
        %v250 = vlaneseq
        %v251 = vshrl.u32 %v250, 7
        %v252 = vsub.s32 0, %v251
        %v253 = vrot.slane %v248, %v252
        %v254 = vlaneseq
        %v255 = vshrl.u32 %v254, 7
        %v256 = vsub.s32 1, %v255
        %v257 = vrot.slane %v248, %v256
        %260 = vmatprep.subr.mxu0 %v247
        %261 = vmatpush1.msra.mxu0 %v246
        %262 = vmatprep.subr.mxu0 %v245
        %263 = vmatpush1.msra.mxu0 %v244
        %264 = vmatprep.subr.mxu0 %v243
        %265 = vmatpush1.msra.mxu0 %v242
        %266 = vmatprep.subr.mxu0 %v241
        %267 = vmatpush1.msra.mxu0 %v240
        %268 = vmatprep.subr.mxu0 %v239
        %269 = vmatpush1.msra.mxu0 %v238
        %270 = vmatprep.subr.mxu0 %v237
        %271 = vmatpush1.msra.mxu0 %v236
        %272 = vmatprep.subr.mxu0 %v235
        %273 = vmatpush1.msra.mxu0 %v234
        %274 = vmatprep.subr.mxu0 %v233
        %275 = vmatpush1.msra.mxu0 %v232
        %276 = vmatprep.subr.mxu0 %v231
        %277 = vmatpush1.msra.mxu0 %v230
        %278 = vmatprep.subr.mxu0 %v229
        %279 = vmatpush1.msra.mxu0 %v228
        %280 = vmatprep.subr.mxu0 %v227
        %281 = vmatpush1.msra.mxu0 %v226
        %282 = vmatprep.subr.mxu0 %v225
        %283 = vmatpush1.msra.mxu0 %v224
        %284 = vmatprep.subr.mxu0 %v223
        %285 = vmatpush1.msra.mxu0 %v222
        %286 = vmatprep.subr.mxu0 %v221
        %287 = vmatpush1.msra.mxu0 %v220
        %288 = vmatprep.subr.mxu0 %v219
        %289 = vmatpush1.msra.mxu0 %v218
        %290 = vmatprep.subr.mxu0 %v217
        %291 = vmatpush1.msra.mxu0 %v216
        %292 = vmatprep.subr.mxu0 0.0
        %293 = vmatpush2.msra.mxu0 0.0
        %294 = vmatprep.subr.mxu0 0.0
        %295 = vmatpush2.msra.mxu0 0.0
        %296 = vmatprep.subr.mxu0 0.0
        %297 = vmatpush2.msra.mxu0 0.0
        %298 = vmatprep.subr.mxu0 0.0
        %299 = vmatpush2.msra.mxu0 0.0
        %300 = vmatprep.subr.mxu0 0.0
        %301 = vmatpush2.msra.mxu0 0.0
        %302 = vmatprep.subr.mxu0 0.0
        %303 = vmatpush2.msra.mxu0 0.0
        %304 = vmatprep.subr.mxu0 0.0
        %305 = vmatpush2.msra.mxu0 0.0
        %306 = vmatprep.subr.mxu0 0.0
        %307 = vmatpush2.msra.mxu0 0.0
        %308 = vmatprep.subr.mxu0 0.0
        %309 = vmatpush2.msra.mxu0 0.0
        %310 = vmatprep.subr.mxu0 0.0
        %311 = vmatpush2.msra.mxu0 0.0
        %312 = vmatprep.subr.mxu0 0.0
        %313 = vmatpush2.msra.mxu0 0.0
        %314 = vmatprep.subr.mxu0 0.0
        %315 = vmatpush2.msra.mxu0 0.0
        %316 = vmatprep.subr.mxu0 0.0
        %317 = vmatpush2.msra.mxu0 0.0
        %318 = vmatprep.subr.mxu0 0.0
        %319 = vmatpush2.msra.mxu0 0.0
        %320 = vmatprep.subr.mxu0 0.0
        %321 = vmatpush2.msra.mxu0 0.0
        %322 = vmatprep.subr.mxu0 0.0
        %323 = vmatpush2.msra.mxu0 0.0
        %324 = vmatprep.mubr.f32.mxu0 0.0
        %325 = vmatmul.mubr.f32.gmra.mxu0 %v215
        %v326 = vpop.f32.mrf.mxu0
        %v327 = vadd.f32 %v253, %v326
        %v328 = vpop.f32.mrf.mxu0
        %v329 = vadd.f32 %v257, %v328
        %330 = vdwg.mxu0
        %v331 = vmax.f32 %v327, 0.0
        %v332 = vxor.u32 %v329, 2147483648
        %v333 = vmul.f32 %v332, 1.442695
        %v334 = vpow.pop %v333
        %v335 = vadd.f32 %v334, 1.0
        %v336 = vrcp.pop %v335
        %v337 = vmul.f32 1.0, %v336
        %v338 = vsub.f32 %v331, %v215
        %v339 = vmul.f32 %v337, %v338
        %v340 = vadd.f32 %v215, %v339
        %s341 = scalar_lea.vmem [#allocation5], 256
        %v342 = vld [vmem:[%s341] sm:$0xff]
        %v343 = vld [vmem:[%s341 + $0x8] sm:$0xff]
        %v344 = vld [vmem:[%s341 + $0x10] sm:$0xff]
        %v345 = vld [vmem:[%s341 + $0x18] sm:$0xff]
        %v346 = vld [vmem:[%s341 + $0x20] sm:$0xff]
        %v347 = vld [vmem:[%s341 + $0x28] sm:$0xff]
        %v348 = vld [vmem:[%s341 + $0x30] sm:$0xff]
        %v349 = vld [vmem:[%s341 + $0x38] sm:$0xff]
        %v350 = vld [vmem:[%s341 + $0x40] sm:$0xff]
        %v351 = vld [vmem:[%s341 + $0x48] sm:$0xff]
        %v352 = vld [vmem:[%s341 + $0x50] sm:$0xff]
        %v353 = vld [vmem:[%s341 + $0x58] sm:$0xff]
        %v354 = vld [vmem:[%s341 + $0x60] sm:$0xff]
        %v355 = vld [vmem:[%s341 + $0x68] sm:$0xff]
        %v356 = vld [vmem:[%s341 + $0x70] sm:$0xff]
        %v357 = vld [vmem:[%s341 + $0x78] sm:$0xff]
        %v358 = vld [vmem:[%s341 + $0x80] sm:$0xff]
        %v359 = vld [vmem:[%s341 + $0x88] sm:$0xff]
        %v360 = vld [vmem:[%s341 + $0x90] sm:$0xff]
        %v361 = vld [vmem:[%s341 + $0x98] sm:$0xff]
        %v362 = vld [vmem:[%s341 + $0xa0] sm:$0xff]
        %v363 = vld [vmem:[%s341 + $0xa8] sm:$0xff]
        %v364 = vld [vmem:[%s341 + $0xb0] sm:$0xff]
        %v365 = vld [vmem:[%s341 + $0xb8] sm:$0xff]
        %v366 = vld [vmem:[%s341 + $0xc0] sm:$0xff]
        %v367 = vld [vmem:[%s341 + $0xc8] sm:$0xff]
        %v368 = vld [vmem:[%s341 + $0xd0] sm:$0xff]
        %v369 = vld [vmem:[%s341 + $0xd8] sm:$0xff]
        %v370 = vld [vmem:[%s341 + $0xe0] sm:$0xff]
        %v371 = vld [vmem:[%s341 + $0xe8] sm:$0xff]
        %v372 = vld [vmem:[%s341 + $0xf0] sm:$0xff]
        %v373 = vld [vmem:[%s341 + $0xf8] sm:$0xff]
        %s374 = scalar_lea.vmem [#allocation7], 2
        %v375 = vld [vmem:[%s374] sm:$0x3]
        %v377 = vlaneseq
        %v378 = vshrl.u32 %v377, 7
        %v379 = vsub.s32 0, %v378
        %v380 = vrot.slane %v375, %v379
        %v381 = vlaneseq
        %v382 = vshrl.u32 %v381, 7
        %v383 = vsub.s32 1, %v382
        %v384 = vrot.slane %v375, %v383
        %387 = vmatprep.subr.mxu0 %v373
        %388 = vmatpush1.msra.mxu0 %v372
        %389 = vmatprep.subr.mxu0 %v371
        %390 = vmatpush1.msra.mxu0 %v370
        %391 = vmatprep.subr.mxu0 %v369
        %392 = vmatpush1.msra.mxu0 %v368
        %393 = vmatprep.subr.mxu0 %v367
        %394 = vmatpush1.msra.mxu0 %v366
        %395 = vmatprep.subr.mxu0 %v365
        %396 = vmatpush1.msra.mxu0 %v364
        %397 = vmatprep.subr.mxu0 %v363
        %398 = vmatpush1.msra.mxu0 %v362
        %399 = vmatprep.subr.mxu0 %v361
        %400 = vmatpush1.msra.mxu0 %v360
        %401 = vmatprep.subr.mxu0 %v359
        %402 = vmatpush1.msra.mxu0 %v358
        %403 = vmatprep.subr.mxu0 %v357
        %404 = vmatpush1.msra.mxu0 %v356
        %405 = vmatprep.subr.mxu0 %v355
        %406 = vmatpush1.msra.mxu0 %v354
        %407 = vmatprep.subr.mxu0 %v353
        %408 = vmatpush1.msra.mxu0 %v352
        %409 = vmatprep.subr.mxu0 %v351
        %410 = vmatpush1.msra.mxu0 %v350
        %411 = vmatprep.subr.mxu0 %v349
        %412 = vmatpush1.msra.mxu0 %v348
        %413 = vmatprep.subr.mxu0 %v347
        %414 = vmatpush1.msra.mxu0 %v346
        %415 = vmatprep.subr.mxu0 %v345
        %416 = vmatpush1.msra.mxu0 %v344
        %417 = vmatprep.subr.mxu0 %v343
        %418 = vmatpush1.msra.mxu0 %v342
        %419 = vmatprep.subr.mxu0 0.0
        %420 = vmatpush2.msra.mxu0 0.0
        %421 = vmatprep.subr.mxu0 0.0
        %422 = vmatpush2.msra.mxu0 0.0
        %423 = vmatprep.subr.mxu0 0.0
        %424 = vmatpush2.msra.mxu0 0.0
        %425 = vmatprep.subr.mxu0 0.0
        %426 = vmatpush2.msra.mxu0 0.0
        %427 = vmatprep.subr.mxu0 0.0
        %428 = vmatpush2.msra.mxu0 0.0
        %429 = vmatprep.subr.mxu0 0.0
        %430 = vmatpush2.msra.mxu0 0.0
        %431 = vmatprep.subr.mxu0 0.0
        %432 = vmatpush2.msra.mxu0 0.0
        %433 = vmatprep.subr.mxu0 0.0
        %434 = vmatpush2.msra.mxu0 0.0
        %435 = vmatprep.subr.mxu0 0.0
        %436 = vmatpush2.msra.mxu0 0.0
        %437 = vmatprep.subr.mxu0 0.0
        %438 = vmatpush2.msra.mxu0 0.0
        %439 = vmatprep.subr.mxu0 0.0
        %440 = vmatpush2.msra.mxu0 0.0
        %441 = vmatprep.subr.mxu0 0.0
        %442 = vmatpush2.msra.mxu0 0.0
        %443 = vmatprep.subr.mxu0 0.0
        %444 = vmatpush2.msra.mxu0 0.0
        %445 = vmatprep.subr.mxu0 0.0
        %446 = vmatpush2.msra.mxu0 0.0
        %447 = vmatprep.subr.mxu0 0.0
        %448 = vmatpush2.msra.mxu0 0.0
        %449 = vmatprep.subr.mxu0 0.0
        %450 = vmatpush2.msra.mxu0 0.0
        %451 = vmatprep.mubr.f32.mxu0 0.0
        %452 = vmatmul.mubr.f32.gmra.mxu0 %v340
        %v453 = vpop.f32.mrf.mxu0
        %v454 = vadd.f32 %v380, %v453
        %v455 = vpop.f32.mrf.mxu0
        %v456 = vadd.f32 %v384, %v455
        %457 = vdwg.mxu0
        %v458 = vmax.f32 %v454, 0.0
        %v459 = vxor.u32 %v456, 2147483648
        %v460 = vmul.f32 %v459, 1.442695
        %v461 = vpow.pop %v460
        %v462 = vadd.f32 %v461, 1.0
        %v463 = vrcp.pop %v462
        %v464 = vmul.f32 1.0, %v463
        %v465 = vsub.f32 %v458, %v340
        %v466 = vmul.f32 %v464, %v465
        %v467 = vadd.f32 %v340, %v466
        %468 = vst [vmem:[%s214] sm:$0xff] %v467
        %s469 = sand.u32 %s97, 1
        %s470 = scalar_lea.sflag [#allocation4], %s469
        %s471 = sand.u32 %s97, 1
        %s472 = smul.addr %s471, 8
        %s473 = scalar_lea.vmem [#allocation8], %s472
        // Predicated region
        $region45: #{tpu_custom_call.1} parent=31 // pred_check
          %p474 = pneg %p107
        $region46: #{tpu_custom_call.1} parent=31 // pred_check_branch
          %476 = sbr.rel (%p474) target = $region48
        $region47: #{tpu_custom_call.1} parent=31 // pred_region
          %s478 = ssub.s32 128, 128
          %479 = vsyncadd %s470, %s478
          %s480 = smul.addr %s21, 128
          %s481 = scalar_lea.hbm %s3, %s480
          %s483 = sshll.u32 %s473, 4
          %s484 = int_to_ptr.vmem [resolvable:$true] %s483
          %486 = dma.vmem_to_hbm [thread:$0]  %s484, 128, %s481, %s470
        $region48: #{tpu_custom_call.1} parent=31 // pred_fallthru
          _
      $region32: #{tpu_custom_call.1} parent=5 // pred_fallthru
        _
      %p487 = scmp.le.s32.totalorder 2, %s16
      // Predicated region
      $region49: #{tpu_custom_call.1} parent=5 // pred_check
        %p488 = pneg %p487
      $region50: #{tpu_custom_call.1} parent=5 // pred_check_branch
        %490 = sbr.rel (%p488) target = $region52
      $region51: #{tpu_custom_call.1} parent=5 // pred_region
        %s491 = ssub.s32 %s16, 2
        // Predicated region
        $region53: #{tpu_custom_call.1} parent=51 // pred_check
          %p492 = pneg %p113
        $region54: #{tpu_custom_call.1} parent=51 // pred_check_branch
          %494 = sbr.rel (%p492) target = $region56
        $region55: #{tpu_custom_call.1} parent=51 // pred_region
          %s495 = sand.u32 %s98, 1
          %s496 = scalar_lea.sflag [#allocation4], %s495
          %s497 = sand.u32 %s98, 1
          %s498 = smul.addr %s497, 8
          %s499 = scalar_lea.vmem [#allocation8], %s498
          %500 = dma.done %s496, 128
        $region56: #{tpu_custom_call.1} parent=51 // pred_fallthru
          _
      $region52: #{tpu_custom_call.1} parent=5 // pred_fallthru
        _
    $region6: #{tpu_custom_call.1} parent=1 // loop_footer
      %s20 = sadd.s32 1, %s16
    $region7: #{tpu_custom_call.1} parent=1 // loop_footer_branch
      %15 = sbr.rel target = $region3
    $region8: #{tpu_custom_call.1} parent=1 // loop_exit
      _
    %501 = vsyncpa [#allocation3], 1
    %s502 = scalar_lea.sflag [#allocation3], 1
    %503 = vsyncpa %s502, 1
    %504 = vsyncpa [#allocation6], 1
    %505 = vsyncpa [#allocation4], 1
    %s506 = scalar_lea.sflag [#allocation4], 1
    %507 = vsyncpa %s506, 1

</llo_original>
